<compile_context>
chip_gen: v7x
topology: tpu7x:2x2x1
jax: 0.10.0
libtpu: 0.0.40
codegen_flags: <defaults>
</compile_context>

<pallas_src>
import numpy as np
import jax
import jax.numpy as jnp
from jax.experimental import pallas as pl
from jax.experimental.pallas import tpu as pltpu

# --- small, module-consistent sizes -----------------------------------------
INPUT_SIZE = 28     # vocabulary of input_embedding
H = 32              # RNN_hidden_size (scaled down from 256)
L = 16              # latent_size     (scaled down from 32)
NUM_COND = 4        # num_condition
COND = 8            # condition_size
SEQ = 8             # sequence length of `inputs`

G4 = 4 * H          # 128 = one full lane width

# packed-constant-slab row offsets (all 8-row aligned -> tile-aligned slices)
_ROW_WHH = 0                 # rows [0, 32):  W_hh (g columns pre-scaled x2)
_ROW_WHEADS_H = H            # rows [32, 64): head weights applied to h
_ROW_WHEADS_C = 2 * H        # rows [64, 96): head weights applied to c
_ROW_BHEADS = 3 * H          # row  96:       head bias
_SLAB_ROWS = 3 * H + 8       # 104 rows x 128 lanes


# --- fused Pallas kernel: (gather+proj) -> LSTM -> heads -> reparam ----------
def encoder_kernel(ids_ref, table_ref, slab_ref, dyn_ref, out_ref):
    # loop-invariant recurrence weight, loaded once (4 vregs)
    w_hh = slab_ref[_ROW_WHH:_ROW_WHH + H, :]                    # (H, 4H)

    h = dyn_ref[:, 0:H]                                          # (1, H) init hidden
    c = dyn_ref[:, 0:H]                                          # (1, H) init cell (== hidden in this module)

    # ---- serial LSTM recurrence, fully unrolled (SEQ static) ----------------
    # x_t = fused_table[id_t] already contains  emb@W_ih + bias  with the
    # g-gate lanes pre-scaled by 2 (single-sigmoid trick below).
    # TODO(synk): could pin W_hh in MXU weight regs via pltpu.matmul_push_rhs /
    # matmul_acc_lhs / matmul_pop; kept jnp.dot for lowering robustness.
    for t in range(SEQ):
        x_t = table_ref[ids_ref[t]]                              # (1, 4H) dynamic row load
        gates = x_t + jnp.dot(h, w_hh, preferred_element_type=jnp.float32)
        sig = jax.nn.sigmoid(gates)                              # one EUP pass / step
        i_g = sig[:, 0 * H:1 * H]
        f_g = sig[:, 1 * H:2 * H]
        g_g = 2.0 * sig[:, 2 * H:3 * H] - 1.0                    # tanh(a) = 2*sigmoid(2a) - 1
        o_g = sig[:, 3 * H:4 * H]
        c = f_g * c + i_g * g_g
        h = o_g * jnp.tanh(c)

    # ---- VAE heads (columns: [h_mean | c_mean | h_logvar | c_logvar | 0...]) -
    w_heads_h = slab_ref[_ROW_WHEADS_H:_ROW_WHEADS_H + H, :]     # (H, 128)
    w_heads_c = slab_ref[_ROW_WHEADS_C:_ROW_WHEADS_C + H, :]     # (H, 128)
    b_heads = slab_ref[_ROW_BHEADS:_ROW_BHEADS + 1, :]           # (1, 128)
    heads = (jnp.dot(h, w_heads_h, preferred_element_type=jnp.float32)
             + jnp.dot(c, w_heads_c, preferred_element_type=jnp.float32)
             + b_heads)                                          # (1, 128), lanes >= 4L are zero

    means = heads[:, 0:2 * L]                                    # [h_mean | c_mean]
    logvars = heads[:, 2 * L:4 * L]                              # [h_logvar | c_logvar]
    eps = dyn_ref[:, H:H + 2 * L]                                # [eps_h | eps_c]
    lat = eps * jnp.exp(logvars * 0.5) + means                   # [h_lat | c_lat]

    # ---- lane-dense (1,128) output slab, 2 stores ----------------------------
    out_ref[:, 0:2 * L] = lat
    out_ref[:, 2 * L:6 * L] = heads[:, 0:4 * L]


_encoder_call = pl.pallas_call(
    encoder_kernel,
    out_shape=jax.ShapeDtypeStruct((1, G4), jnp.float32),
    in_specs=[
        pl.BlockSpec(memory_space=pltpu.MemorySpace.SMEM),   # token ids (SEQ,) i32
        pl.BlockSpec(memory_space=pltpu.MemorySpace.VMEM),   # fused table (V, 1, 4H)
        pl.BlockSpec(memory_space=pltpu.MemorySpace.VMEM),   # packed constant slab
        pl.BlockSpec(memory_space=pltpu.MemorySpace.VMEM),   # packed per-call row (h0|eps)
    ],
    out_specs=pl.BlockSpec(memory_space=pltpu.MemorySpace.VMEM),
)


# --- parameter init (deterministic, PyTorch-like scales) + packing -----------
def init_params(key):
    ks = jax.random.split(key, 14)
    k_lstm = 1.0 / np.sqrt(H)
    k_lin = 1.0 / np.sqrt(H)
    u = lambda k, shape, a: jax.random.uniform(k, shape, jnp.float32, -a, a)
    p = dict(
        cond_emb=jax.random.normal(ks[0], (NUM_COND, COND), jnp.float32),
        in_emb=jax.random.normal(ks[1], (INPUT_SIZE, H), jnp.float32),
        w_ih=u(ks[2], (H, G4), k_lstm),
        w_hh=u(ks[3], (H, G4), k_lstm),
        b=u(ks[4], (1, G4), k_lstm) + u(ks[5], (1, G4), k_lstm),   # b_ih + b_hh
        w_mh=u(ks[6], (H, L), k_lin), b_mh=u(ks[7], (1, L), k_lin),
        w_lh=u(ks[8], (H, L), k_lin), b_lh=u(ks[9], (1, L), k_lin),
        w_mc=u(ks[10], (H, L), k_lin), b_mc=u(ks[11], (1, L), k_lin),
        w_lc=u(ks[12], (H, L), k_lin), b_lc=u(ks[13], (1, L), k_lin),
    )

    # x2 scaling of the g-gate columns so the kernel needs only sigmoid
    g_scale = jnp.ones((G4,), jnp.float32).at[2 * H:3 * H].set(2.0)

    # fold embedding x input-projection x bias into one lookup table
    fused = (p['in_emb'] @ p['w_ih'] + p['b']) * g_scale             # (V, 4H)
    p['fused_table'] = fused.reshape(INPUT_SIZE, 1, G4)              # (V, 1, 4H)

    # pack W_hh + head weights + head bias into one (104,128) lane-dense slab
    w_hh_s = p['w_hh'] * g_scale                                     # (H, 4H)
    zL = jnp.zeros((H, L), jnp.float32)
    zpadH = jnp.zeros((H, G4 - 4 * L), jnp.float32)
    w_heads_h = jnp.concatenate([p['w_mh'], zL, p['w_lh'], zL, zpadH], axis=1)  # (H,128)
    w_heads_c = jnp.concatenate([zL, p['w_mc'], zL, p['w_lc'], zpadH], axis=1)  # (H,128)
    b_heads = jnp.concatenate([p['b_mh'], p['b_mc'], p['b_lh'], p['b_lc'],
                               jnp.zeros((1, G4 - 4 * L), jnp.float32)], axis=1)
    b_pad = jnp.zeros((7, G4), jnp.float32)
    p['slab'] = jnp.concatenate([w_hh_s, w_heads_h, w_heads_c, b_heads, b_pad],
                                axis=0)                              # (104, 128)
    assert p['slab'].shape == (_SLAB_ROWS, G4)
    return p


# --- Encoder.forward ----------------------------------------------------------
def encoder_forward(params, inputs, condition, init_hidden, eps_h, eps_c):
    # tiny one-time glue in the jitted wrapper: condition-embedding lookup and
    # packing the per-call small inputs into a single (1,128) row.
    c_emb = params['cond_emb'][condition].reshape(1, COND)
    h0 = jnp.concatenate([init_hidden.reshape(1, H - COND), c_emb], axis=1)     # (1, H)
    eps = jnp.concatenate([eps_h.reshape(1, L), eps_c.reshape(1, L)], axis=1)   # (1, 2L)
    dyn = jnp.concatenate(
        [h0, eps, jnp.zeros((1, G4 - H - 2 * L), jnp.float32)], axis=1)         # (1, 128)
    ids = inputs.reshape(SEQ).astype(jnp.int32)                                 # (SEQ,)

    out = _encoder_call(ids, params['fused_table'], params['slab'], dyn)        # (1, 128)

    h_lat, c_lat = out[:, 0:L], out[:, L:2 * L]
    h_mean, c_mean = out[:, 2 * L:3 * L], out[:, 3 * L:4 * L]
    h_logvar, c_logvar = out[:, 4 * L:5 * L], out[:, 5 * L:6 * L]

    # match PyTorch output shapes (1, 1, latent_size)
    r = lambda a: a.reshape(1, 1, L)
    return (r(h_lat), r(h_mean), r(h_logvar), r(c_lat), r(c_mean), r(c_logvar))


# --- pure-JAX reference for sanity (uses the unfused parameters) --------------
def reference_forward(params, inputs, condition, init_hidden, eps_h, eps_c):
    c_emb = params['cond_emb'][condition].reshape(1, COND)
    x_emb = params['in_emb'][inputs].reshape(-1, H)
    h0 = jnp.concatenate([init_hidden.reshape(1, H - COND), c_emb], axis=1)

    def step(carry, x):
        h, c = carry
        g = x[None, :] @ params['w_ih'] + h @ params['w_hh'] + params['b']
        i = jax.nn.sigmoid(g[:, 0 * H:1 * H])
        f = jax.nn.sigmoid(g[:, 1 * H:2 * H])
        gg = jnp.tanh(g[:, 2 * H:3 * H])
        o = jax.nn.sigmoid(g[:, 3 * H:4 * H])
        c_new = f * c + i * gg
        h_new = o * jnp.tanh(c_new)
        return (h_new, c_new), None

    (h, c), _ = jax.lax.scan(step, (h0, h0), x_emb)
    hm = h @ params['w_mh'] + params['b_mh']
    hl = h @ params['w_lh'] + params['b_lh']
    cm = c @ params['w_mc'] + params['b_mc']
    cl = c @ params['w_lc'] + params['b_lc']
    hz = eps_h.reshape(1, L) * jnp.exp(hl * 0.5) + hm
    cz = eps_c.reshape(1, L) * jnp.exp(cl * 0.5) + cm
    r = lambda a: a.reshape(1, 1, L)
    return (r(hz), r(hm), r(hl), r(cz), r(cm), r(cl))


if __name__ == "__main__":
    key = jax.random.PRNGKey(0)
    k_param, k_in, k_eps_h, k_eps_c = jax.random.split(key, 4)

    params = init_params(k_param)
    inputs = jax.random.randint(k_in, (SEQ,), 0, INPUT_SIZE)      # token ids
    condition = 2
    init_hidden = jnp.zeros((1, 1, H - COND), jnp.float32)        # initHiddenCell()
    eps_h = jax.random.normal(k_eps_h, (L,), jnp.float32)         # sampling() noise (externalized)
    eps_c = jax.random.normal(k_eps_c, (L,), jnp.float32)         # sampling() noise (externalized)

    fwd = jax.jit(encoder_forward)
    out = fwd(params, inputs, condition, init_hidden, eps_h, eps_c)
    out = jax.block_until_ready(out)

    ref = reference_forward(params, inputs, condition, init_hidden, eps_h, eps_c)
    for a, b in zip(out, ref):
        np.testing.assert_allclose(np.asarray(a), np.asarray(b),
                                   rtol=1e-3, atol=1e-3)

    print("KERNEL_OK")
</pallas_src>

<mosaic_0001>
module attributes {stable_mosaic.version = 11 : i64} {
  func.func @encoder_kernel(%arg0: memref<8xi32, #tpu.memory_space<smem>>, %arg1: memref<28x1x128xf32, #tpu.memory_space<vmem>>, %arg2: memref<104x128xf32, #tpu.memory_space<vmem>>, %arg3: memref<1x128xf32, #tpu.memory_space<vmem>>, %arg4: memref<1x128xf32, #tpu.memory_space<vmem>>) attributes {dimension_semantics = [], scalar_prefetch = 0 : i64, scratch_operands = 0 : i64, tpu.core_type = #tpu.core_type<tc>} {
    %c0 = arith.constant 0 : index
    %c0_0 = arith.constant 0 : index
    %0 = vector.load %arg2[%c0, %c0_0] : memref<104x128xf32, #tpu.memory_space<vmem>>, vector<32x128xf32>
    %c0_1 = arith.constant 0 : index
    %c0_2 = arith.constant 0 : index
    %1 = vector.load %arg3[%c0_1, %c0_2] : memref<1x128xf32, #tpu.memory_space<vmem>>, vector<1x32xf32>
    %c0_3 = arith.constant 0 : index
    %c0_4 = arith.constant 0 : index
    %2 = vector.load %arg3[%c0_3, %c0_4] : memref<1x128xf32, #tpu.memory_space<vmem>>, vector<1x32xf32>
    %c0_5 = arith.constant 0 : index
    %3 = memref.load %arg0[%c0_5] : memref<8xi32, #tpu.memory_space<smem>>
    %4 = arith.index_cast %3 : i32 to index
    %c0_6 = arith.constant 0 : index
    %c0_7 = arith.constant 0 : index
    %5 = vector.load %arg1[%4, %c0_6, %c0_7] : memref<28x1x128xf32, #tpu.memory_space<vmem>>, vector<1x1x128xf32>
    %6 = vector.shape_cast %5 : vector<1x1x128xf32> to vector<1x128xf32>
    %cst = arith.constant dense<0.000000e+00> : vector<1x128xf32>
    %7 = tpu.matmul %1, %0, %cst {dimension_numbers = #tpu.dot_dimension_numbers<[1], [0], [0], [1], [0, 0, 1, 1], [], []>} : vector<1x32xf32>, vector<32x128xf32>, vector<1x128xf32> -> vector<1x128xf32>
    %8 = arith.addf %6, %7 : vector<1x128xf32>
    %9 = arith.negf %8 : vector<1x128xf32>
    %10 = math.exp %9 : vector<1x128xf32>
    %cst_8 = arith.constant 1.000000e+00 : f32
    %11 = vector.broadcast %cst_8 : f32 to vector<1x128xf32>
    %12 = arith.addf %11, %10 : vector<1x128xf32>
    %13 = arith.divf %11, %12 : vector<1x128xf32>
    %14 = vector.extract_strided_slice %13 {offsets = [0, 0], sizes = [1, 32], strides = [1, 1]} : vector<1x128xf32> to vector<1x32xf32>
    %15 = vector.extract_strided_slice %13 {offsets = [0, 32], sizes = [1, 32], strides = [1, 1]} : vector<1x128xf32> to vector<1x32xf32>
    %16 = vector.extract_strided_slice %13 {offsets = [0, 64], sizes = [1, 32], strides = [1, 1]} : vector<1x128xf32> to vector<1x32xf32>
    %cst_9 = arith.constant 2.000000e+00 : f32
    %17 = vector.broadcast %cst_9 : f32 to vector<1x32xf32>
    %18 = arith.mulf %17, %16 : vector<1x32xf32>
    %cst_10 = arith.constant 1.000000e+00 : f32
    %19 = vector.broadcast %cst_10 : f32 to vector<1x32xf32>
    %20 = arith.subf %18, %19 : vector<1x32xf32>
    %21 = vector.extract_strided_slice %13 {offsets = [0, 96], sizes = [1, 32], strides = [1, 1]} : vector<1x128xf32> to vector<1x32xf32>
    %22 = arith.mulf %15, %2 : vector<1x32xf32>
    %23 = arith.mulf %14, %20 : vector<1x32xf32>
    %24 = arith.addf %22, %23 : vector<1x32xf32>
    %25 = math.tanh %24 : vector<1x32xf32>
    %26 = arith.mulf %21, %25 : vector<1x32xf32>
    %c1 = arith.constant 1 : index
    %27 = memref.load %arg0[%c1] : memref<8xi32, #tpu.memory_space<smem>>
    %28 = arith.index_cast %27 : i32 to index
    %c0_11 = arith.constant 0 : index
    %c0_12 = arith.constant 0 : index
    %29 = vector.load %arg1[%28, %c0_11, %c0_12] : memref<28x1x128xf32, #tpu.memory_space<vmem>>, vector<1x1x128xf32>
    %30 = vector.shape_cast %29 : vector<1x1x128xf32> to vector<1x128xf32>
    %cst_13 = arith.constant dense<0.000000e+00> : vector<1x128xf32>
    %31 = tpu.matmul %26, %0, %cst_13 {dimension_numbers = #tpu.dot_dimension_numbers<[1], [0], [0], [1], [0, 0, 1, 1], [], []>} : vector<1x32xf32>, vector<32x128xf32>, vector<1x128xf32> -> vector<1x128xf32>
    %32 = arith.addf %30, %31 : vector<1x128xf32>
    %33 = arith.negf %32 : vector<1x128xf32>
    %34 = math.exp %33 : vector<1x128xf32>
    %cst_14 = arith.constant 1.000000e+00 : f32
    %35 = vector.broadcast %cst_14 : f32 to vector<1x128xf32>
    %36 = arith.addf %35, %34 : vector<1x128xf32>
    %37 = arith.divf %35, %36 : vector<1x128xf32>
    %38 = vector.extract_strided_slice %37 {offsets = [0, 0], sizes = [1, 32], strides = [1, 1]} : vector<1x128xf32> to vector<1x32xf32>
    %39 = vector.extract_strided_slice %37 {offsets = [0, 32], sizes = [1, 32], strides = [1, 1]} : vector<1x128xf32> to vector<1x32xf32>
    %40 = vector.extract_strided_slice %37 {offsets = [0, 64], sizes = [1, 32], strides = [1, 1]} : vector<1x128xf32> to vector<1x32xf32>
    %cst_15 = arith.constant 2.000000e+00 : f32
    %41 = vector.broadcast %cst_15 : f32 to vector<1x32xf32>
    %42 = arith.mulf %41, %40 : vector<1x32xf32>
    %cst_16 = arith.constant 1.000000e+00 : f32
    %43 = vector.broadcast %cst_16 : f32 to vector<1x32xf32>
    %44 = arith.subf %42, %43 : vector<1x32xf32>
    %45 = vector.extract_strided_slice %37 {offsets = [0, 96], sizes = [1, 32], strides = [1, 1]} : vector<1x128xf32> to vector<1x32xf32>
    %46 = arith.mulf %39, %24 : vector<1x32xf32>
    %47 = arith.mulf %38, %44 : vector<1x32xf32>
    %48 = arith.addf %46, %47 : vector<1x32xf32>
    %49 = math.tanh %48 : vector<1x32xf32>
    %50 = arith.mulf %45, %49 : vector<1x32xf32>
    %c2 = arith.constant 2 : index
    %51 = memref.load %arg0[%c2] : memref<8xi32, #tpu.memory_space<smem>>
    %52 = arith.index_cast %51 : i32 to index
    %c0_17 = arith.constant 0 : index
    %c0_18 = arith.constant 0 : index
    %53 = vector.load %arg1[%52, %c0_17, %c0_18] : memref<28x1x128xf32, #tpu.memory_space<vmem>>, vector<1x1x128xf32>
    %54 = vector.shape_cast %53 : vector<1x1x128xf32> to vector<1x128xf32>
    %cst_19 = arith.constant dense<0.000000e+00> : vector<1x128xf32>
    %55 = tpu.matmul %50, %0, %cst_19 {dimension_numbers = #tpu.dot_dimension_numbers<[1], [0], [0], [1], [0, 0, 1, 1], [], []>} : vector<1x32xf32>, vector<32x128xf32>, vector<1x128xf32> -> vector<1x128xf32>
    %56 = arith.addf %54, %55 : vector<1x128xf32>
    %57 = arith.negf %56 : vector<1x128xf32>
    %58 = math.exp %57 : vector<1x128xf32>
    %cst_20 = arith.constant 1.000000e+00 : f32
    %59 = vector.broadcast %cst_20 : f32 to vector<1x128xf32>
    %60 = arith.addf %59, %58 : vector<1x128xf32>
    %61 = arith.divf %59, %60 : vector<1x128xf32>
    %62 = vector.extract_strided_slice %61 {offsets = [0, 0], sizes = [1, 32], strides = [1, 1]} : vector<1x128xf32> to vector<1x32xf32>
    %63 = vector.extract_strided_slice %61 {offsets = [0, 32], sizes = [1, 32], strides = [1, 1]} : vector<1x128xf32> to vector<1x32xf32>
    %64 = vector.extract_strided_slice %61 {offsets = [0, 64], sizes = [1, 32], strides = [1, 1]} : vector<1x128xf32> to vector<1x32xf32>
    %cst_21 = arith.constant 2.000000e+00 : f32
    %65 = vector.broadcast %cst_21 : f32 to vector<1x32xf32>
    %66 = arith.mulf %65, %64 : vector<1x32xf32>
    %cst_22 = arith.constant 1.000000e+00 : f32
    %67 = vector.broadcast %cst_22 : f32 to vector<1x32xf32>
    %68 = arith.subf %66, %67 : vector<1x32xf32>
    %69 = vector.extract_strided_slice %61 {offsets = [0, 96], sizes = [1, 32], strides = [1, 1]} : vector<1x128xf32> to vector<1x32xf32>
    %70 = arith.mulf %63, %48 : vector<1x32xf32>
    %71 = arith.mulf %62, %68 : vector<1x32xf32>
    %72 = arith.addf %70, %71 : vector<1x32xf32>
    %73 = math.tanh %72 : vector<1x32xf32>
    %74 = arith.mulf %69, %73 : vector<1x32xf32>
    %c3 = arith.constant 3 : index
    %75 = memref.load %arg0[%c3] : memref<8xi32, #tpu.memory_space<smem>>
    %76 = arith.index_cast %75 : i32 to index
    %c0_23 = arith.constant 0 : index
    %c0_24 = arith.constant 0 : index
    %77 = vector.load %arg1[%76, %c0_23, %c0_24] : memref<28x1x128xf32, #tpu.memory_space<vmem>>, vector<1x1x128xf32>
    %78 = vector.shape_cast %77 : vector<1x1x128xf32> to vector<1x128xf32>
    %cst_25 = arith.constant dense<0.000000e+00> : vector<1x128xf32>
    %79 = tpu.matmul %74, %0, %cst_25 {dimension_numbers = #tpu.dot_dimension_numbers<[1], [0], [0], [1], [0, 0, 1, 1], [], []>} : vector<1x32xf32>, vector<32x128xf32>, vector<1x128xf32> -> vector<1x128xf32>
    %80 = arith.addf %78, %79 : vector<1x128xf32>
    %81 = arith.negf %80 : vector<1x128xf32>
    %82 = math.exp %81 : vector<1x128xf32>
    %cst_26 = arith.constant 1.000000e+00 : f32
    %83 = vector.broadcast %cst_26 : f32 to vector<1x128xf32>
    %84 = arith.addf %83, %82 : vector<1x128xf32>
    %85 = arith.divf %83, %84 : vector<1x128xf32>
    %86 = vector.extract_strided_slice %85 {offsets = [0, 0], sizes = [1, 32], strides = [1, 1]} : vector<1x128xf32> to vector<1x32xf32>
    %87 = vector.extract_strided_slice %85 {offsets = [0, 32], sizes = [1, 32], strides = [1, 1]} : vector<1x128xf32> to vector<1x32xf32>
    %88 = vector.extract_strided_slice %85 {offsets = [0, 64], sizes = [1, 32], strides = [1, 1]} : vector<1x128xf32> to vector<1x32xf32>
    %cst_27 = arith.constant 2.000000e+00 : f32
    %89 = vector.broadcast %cst_27 : f32 to vector<1x32xf32>
    %90 = arith.mulf %89, %88 : vector<1x32xf32>
    %cst_28 = arith.constant 1.000000e+00 : f32
    %91 = vector.broadcast %cst_28 : f32 to vector<1x32xf32>
    %92 = arith.subf %90, %91 : vector<1x32xf32>
    %93 = vector.extract_strided_slice %85 {offsets = [0, 96], sizes = [1, 32], strides = [1, 1]} : vector<1x128xf32> to vector<1x32xf32>
    %94 = arith.mulf %87, %72 : vector<1x32xf32>
    %95 = arith.mulf %86, %92 : vector<1x32xf32>
    %96 = arith.addf %94, %95 : vector<1x32xf32>
    %97 = math.tanh %96 : vector<1x32xf32>
    %98 = arith.mulf %93, %97 : vector<1x32xf32>
    %c4 = arith.constant 4 : index
    %99 = memref.load %arg0[%c4] : memref<8xi32, #tpu.memory_space<smem>>
    %100 = arith.index_cast %99 : i32 to index
    %c0_29 = arith.constant 0 : index
    %c0_30 = arith.constant 0 : index
    %101 = vector.load %arg1[%100, %c0_29, %c0_30] : memref<28x1x128xf32, #tpu.memory_space<vmem>>, vector<1x1x128xf32>
    %102 = vector.shape_cast %101 : vector<1x1x128xf32> to vector<1x128xf32>
    %cst_31 = arith.constant dense<0.000000e+00> : vector<1x128xf32>
    %103 = tpu.matmul %98, %0, %cst_31 {dimension_numbers = #tpu.dot_dimension_numbers<[1], [0], [0], [1], [0, 0, 1, 1], [], []>} : vector<1x32xf32>, vector<32x128xf32>, vector<1x128xf32> -> vector<1x128xf32>
    %104 = arith.addf %102, %103 : vector<1x128xf32>
    %105 = arith.negf %104 : vector<1x128xf32>
    %106 = math.exp %105 : vector<1x128xf32>
    %cst_32 = arith.constant 1.000000e+00 : f32
    %107 = vector.broadcast %cst_32 : f32 to vector<1x128xf32>
    %108 = arith.addf %107, %106 : vector<1x128xf32>
    %109 = arith.divf %107, %108 : vector<1x128xf32>
    %110 = vector.extract_strided_slice %109 {offsets = [0, 0], sizes = [1, 32], strides = [1, 1]} : vector<1x128xf32> to vector<1x32xf32>
    %111 = vector.extract_strided_slice %109 {offsets = [0, 32], sizes = [1, 32], strides = [1, 1]} : vector<1x128xf32> to vector<1x32xf32>
    %112 = vector.extract_strided_slice %109 {offsets = [0, 64], sizes = [1, 32], strides = [1, 1]} : vector<1x128xf32> to vector<1x32xf32>
    %cst_33 = arith.constant 2.000000e+00 : f32
    %113 = vector.broadcast %cst_33 : f32 to vector<1x32xf32>
    %114 = arith.mulf %113, %112 : vector<1x32xf32>
    %cst_34 = arith.constant 1.000000e+00 : f32
    %115 = vector.broadcast %cst_34 : f32 to vector<1x32xf32>
    %116 = arith.subf %114, %115 : vector<1x32xf32>
    %117 = vector.extract_strided_slice %109 {offsets = [0, 96], sizes = [1, 32], strides = [1, 1]} : vector<1x128xf32> to vector<1x32xf32>
    %118 = arith.mulf %111, %96 : vector<1x32xf32>
    %119 = arith.mulf %110, %116 : vector<1x32xf32>
    %120 = arith.addf %118, %119 : vector<1x32xf32>
    %121 = math.tanh %120 : vector<1x32xf32>
    %122 = arith.mulf %117, %121 : vector<1x32xf32>
    %c5 = arith.constant 5 : index
    %123 = memref.load %arg0[%c5] : memref<8xi32, #tpu.memory_space<smem>>
    %124 = arith.index_cast %123 : i32 to index
    %c0_35 = arith.constant 0 : index
    %c0_36 = arith.constant 0 : index
    %125 = vector.load %arg1[%124, %c0_35, %c0_36] : memref<28x1x128xf32, #tpu.memory_space<vmem>>, vector<1x1x128xf32>
    %126 = vector.shape_cast %125 : vector<1x1x128xf32> to vector<1x128xf32>
    %cst_37 = arith.constant dense<0.000000e+00> : vector<1x128xf32>
    %127 = tpu.matmul %122, %0, %cst_37 {dimension_numbers = #tpu.dot_dimension_numbers<[1], [0], [0], [1], [0, 0, 1, 1], [], []>} : vector<1x32xf32>, vector<32x128xf32>, vector<1x128xf32> -> vector<1x128xf32>
    %128 = arith.addf %126, %127 : vector<1x128xf32>
    %129 = arith.negf %128 : vector<1x128xf32>
    %130 = math.exp %129 : vector<1x128xf32>
    %cst_38 = arith.constant 1.000000e+00 : f32
    %131 = vector.broadcast %cst_38 : f32 to vector<1x128xf32>
    %132 = arith.addf %131, %130 : vector<1x128xf32>
    %133 = arith.divf %131, %132 : vector<1x128xf32>
    %134 = vector.extract_strided_slice %133 {offsets = [0, 0], sizes = [1, 32], strides = [1, 1]} : vector<1x128xf32> to vector<1x32xf32>
    %135 = vector.extract_strided_slice %133 {offsets = [0, 32], sizes = [1, 32], strides = [1, 1]} : vector<1x128xf32> to vector<1x32xf32>
    %136 = vector.extract_strided_slice %133 {offsets = [0, 64], sizes = [1, 32], strides = [1, 1]} : vector<1x128xf32> to vector<1x32xf32>
    %cst_39 = arith.constant 2.000000e+00 : f32
    %137 = vector.broadcast %cst_39 : f32 to vector<1x32xf32>
    %138 = arith.mulf %137, %136 : vector<1x32xf32>
    %cst_40 = arith.constant 1.000000e+00 : f32
    %139 = vector.broadcast %cst_40 : f32 to vector<1x32xf32>
    %140 = arith.subf %138, %139 : vector<1x32xf32>
    %141 = vector.extract_strided_slice %133 {offsets = [0, 96], sizes = [1, 32], strides = [1, 1]} : vector<1x128xf32> to vector<1x32xf32>
    %142 = arith.mulf %135, %120 : vector<1x32xf32>
    %143 = arith.mulf %134, %140 : vector<1x32xf32>
    %144 = arith.addf %142, %143 : vector<1x32xf32>
    %145 = math.tanh %144 : vector<1x32xf32>
    %146 = arith.mulf %141, %145 : vector<1x32xf32>
    %c6 = arith.constant 6 : index
    %147 = memref.load %arg0[%c6] : memref<8xi32, #tpu.memory_space<smem>>
    %148 = arith.index_cast %147 : i32 to index
    %c0_41 = arith.constant 0 : index
    %c0_42 = arith.constant 0 : index
    %149 = vector.load %arg1[%148, %c0_41, %c0_42] : memref<28x1x128xf32, #tpu.memory_space<vmem>>, vector<1x1x128xf32>
    %150 = vector.shape_cast %149 : vector<1x1x128xf32> to vector<1x128xf32>
    %cst_43 = arith.constant dense<0.000000e+00> : vector<1x128xf32>
    %151 = tpu.matmul %146, %0, %cst_43 {dimension_numbers = #tpu.dot_dimension_numbers<[1], [0], [0], [1], [0, 0, 1, 1], [], []>} : vector<1x32xf32>, vector<32x128xf32>, vector<1x128xf32> -> vector<1x128xf32>
    %152 = arith.addf %150, %151 : vector<1x128xf32>
    %153 = arith.negf %152 : vector<1x128xf32>
    %154 = math.exp %153 : vector<1x128xf32>
    %cst_44 = arith.constant 1.000000e+00 : f32
    %155 = vector.broadcast %cst_44 : f32 to vector<1x128xf32>
    %156 = arith.addf %155, %154 : vector<1x128xf32>
    %157 = arith.divf %155, %156 : vector<1x128xf32>
    %158 = vector.extract_strided_slice %157 {offsets = [0, 0], sizes = [1, 32], strides = [1, 1]} : vector<1x128xf32> to vector<1x32xf32>
    %159 = vector.extract_strided_slice %157 {offsets = [0, 32], sizes = [1, 32], strides = [1, 1]} : vector<1x128xf32> to vector<1x32xf32>
    %160 = vector.extract_strided_slice %157 {offsets = [0, 64], sizes = [1, 32], strides = [1, 1]} : vector<1x128xf32> to vector<1x32xf32>
    %cst_45 = arith.constant 2.000000e+00 : f32
    %161 = vector.broadcast %cst_45 : f32 to vector<1x32xf32>
    %162 = arith.mulf %161, %160 : vector<1x32xf32>
    %cst_46 = arith.constant 1.000000e+00 : f32
    %163 = vector.broadcast %cst_46 : f32 to vector<1x32xf32>
    %164 = arith.subf %162, %163 : vector<1x32xf32>
    %165 = vector.extract_strided_slice %157 {offsets = [0, 96], sizes = [1, 32], strides = [1, 1]} : vector<1x128xf32> to vector<1x32xf32>
    %166 = arith.mulf %159, %144 : vector<1x32xf32>
    %167 = arith.mulf %158, %164 : vector<1x32xf32>
    %168 = arith.addf %166, %167 : vector<1x32xf32>
    %169 = math.tanh %168 : vector<1x32xf32>
    %170 = arith.mulf %165, %169 : vector<1x32xf32>
    %c7 = arith.constant 7 : index
    %171 = memref.load %arg0[%c7] : memref<8xi32, #tpu.memory_space<smem>>
    %172 = arith.index_cast %171 : i32 to index
    %c0_47 = arith.constant 0 : index
    %c0_48 = arith.constant 0 : index
    %173 = vector.load %arg1[%172, %c0_47, %c0_48] : memref<28x1x128xf32, #tpu.memory_space<vmem>>, vector<1x1x128xf32>
    %174 = vector.shape_cast %173 : vector<1x1x128xf32> to vector<1x128xf32>
    %cst_49 = arith.constant dense<0.000000e+00> : vector<1x128xf32>
    %175 = tpu.matmul %170, %0, %cst_49 {dimension_numbers = #tpu.dot_dimension_numbers<[1], [0], [0], [1], [0, 0, 1, 1], [], []>} : vector<1x32xf32>, vector<32x128xf32>, vector<1x128xf32> -> vector<1x128xf32>
    %176 = arith.addf %174, %175 : vector<1x128xf32>
    %177 = arith.negf %176 : vector<1x128xf32>
    %178 = math.exp %177 : vector<1x128xf32>
    %cst_50 = arith.constant 1.000000e+00 : f32
    %179 = vector.broadcast %cst_50 : f32 to vector<1x128xf32>
    %180 = arith.addf %179, %178 : vector<1x128xf32>
    %181 = arith.divf %179, %180 : vector<1x128xf32>
    %182 = vector.extract_strided_slice %181 {offsets = [0, 0], sizes = [1, 32], strides = [1, 1]} : vector<1x128xf32> to vector<1x32xf32>
    %183 = vector.extract_strided_slice %181 {offsets = [0, 32], sizes = [1, 32], strides = [1, 1]} : vector<1x128xf32> to vector<1x32xf32>
    %184 = vector.extract_strided_slice %181 {offsets = [0, 64], sizes = [1, 32], strides = [1, 1]} : vector<1x128xf32> to vector<1x32xf32>
    %cst_51 = arith.constant 2.000000e+00 : f32
    %185 = vector.broadcast %cst_51 : f32 to vector<1x32xf32>
    %186 = arith.mulf %185, %184 : vector<1x32xf32>
    %cst_52 = arith.constant 1.000000e+00 : f32
    %187 = vector.broadcast %cst_52 : f32 to vector<1x32xf32>
    %188 = arith.subf %186, %187 : vector<1x32xf32>
    %189 = vector.extract_strided_slice %181 {offsets = [0, 96], sizes = [1, 32], strides = [1, 1]} : vector<1x128xf32> to vector<1x32xf32>
    %190 = arith.mulf %183, %168 : vector<1x32xf32>
    %191 = arith.mulf %182, %188 : vector<1x32xf32>
    %192 = arith.addf %190, %191 : vector<1x32xf32>
    %193 = math.tanh %192 : vector<1x32xf32>
    %194 = arith.mulf %189, %193 : vector<1x32xf32>
    %c32 = arith.constant 32 : index
    %c0_53 = arith.constant 0 : index
    %195 = vector.load %arg2[%c32, %c0_53] : memref<104x128xf32, #tpu.memory_space<vmem>>, vector<32x128xf32>
    %c64 = arith.constant 64 : index
    %c0_54 = arith.constant 0 : index
    %196 = vector.load %arg2[%c64, %c0_54] : memref<104x128xf32, #tpu.memory_space<vmem>>, vector<32x128xf32>
    %c96 = arith.constant 96 : index
    %c0_55 = arith.constant 0 : index
    %197 = vector.load %arg2[%c96, %c0_55] : memref<104x128xf32, #tpu.memory_space<vmem>>, vector<1x128xf32>
    %cst_56 = arith.constant dense<0.000000e+00> : vector<1x128xf32>
    %198 = tpu.matmul %194, %195, %cst_56 {dimension_numbers = #tpu.dot_dimension_numbers<[1], [0], [0], [1], [0, 0, 1, 1], [], []>} : vector<1x32xf32>, vector<32x128xf32>, vector<1x128xf32> -> vector<1x128xf32>
    %cst_57 = arith.constant dense<0.000000e+00> : vector<1x128xf32>
    %199 = tpu.matmul %192, %196, %cst_57 {dimension_numbers = #tpu.dot_dimension_numbers<[1], [0], [0], [1], [0, 0, 1, 1], [], []>} : vector<1x32xf32>, vector<32x128xf32>, vector<1x128xf32> -> vector<1x128xf32>
    %200 = arith.addf %198, %199 : vector<1x128xf32>
    %201 = arith.addf %200, %197 : vector<1x128xf32>
    %202 = vector.extract_strided_slice %201 {offsets = [0, 0], sizes = [1, 32], strides = [1, 1]} : vector<1x128xf32> to vector<1x32xf32>
    %203 = vector.extract_strided_slice %201 {offsets = [0, 32], sizes = [1, 32], strides = [1, 1]} : vector<1x128xf32> to vector<1x32xf32>
    %c0_58 = arith.constant 0 : index
    %c32_59 = arith.constant 32 : index
    %204 = vector.load %arg3[%c0_58, %c32_59] : memref<1x128xf32, #tpu.memory_space<vmem>>, vector<1x32xf32>
    %cst_60 = arith.constant 5.000000e-01 : f32
    %205 = vector.broadcast %cst_60 : f32 to vector<1x32xf32>
    %206 = arith.mulf %203, %205 : vector<1x32xf32>
    %207 = math.exp %206 : vector<1x32xf32>
    %208 = arith.mulf %204, %207 : vector<1x32xf32>
    %209 = arith.addf %208, %202 : vector<1x32xf32>
    %c0_61 = arith.constant 0 : index
    %c0_62 = arith.constant 0 : index
    %210 = vector.load %arg4[%c0_61, %c0_62] : memref<1x128xf32, #tpu.memory_space<vmem>>, vector<1x32xf32>
    tpu.vector_store %arg4[%c0_61, %c0_62], %209 {strides = array<i32>} : memref<1x128xf32, #tpu.memory_space<vmem>>, vector<1x32xf32>,
    %211 = vector.extract_strided_slice %201 {offsets = [0, 0], sizes = [1, 64], strides = [1, 1]} : vector<1x128xf32> to vector<1x64xf32>
    %c0_63 = arith.constant 0 : index
    %c32_64 = arith.constant 32 : index
    %212 = vector.load %arg4[%c0_63, %c32_64] : memref<1x128xf32, #tpu.memory_space<vmem>>, vector<1x64xf32>
    tpu.vector_store %arg4[%c0_63, %c32_64], %211 {strides = array<i32>} : memref<1x128xf32, #tpu.memory_space<vmem>>, vector<1x64xf32>,
    return
  }
}

</mosaic_0001>

<llo_original>
// kernel: encoder_forward.1
$region0: #{encoder_forward.1}
  #allocation0 [shape = 'u32[]', space=smem, size = 0x4, offset = 0x4, fixed_abs, tag = 'smem constant byte address 0x4 - core index']
  #allocation1 [shape = 'u32[144,128]{1,0:T(1,128)}', space=vmem, size = 0x12000, scoped, tag = 'internal scratch']
  %s0 = inlined_call_operand.vmem [shape: s32[8], index: 0, kind: input, shape index: {}]
  %s1 = inlined_call_operand.vmem [shape: f32[28,1,128], index: 1, kind: input, shape index: {}]
  %s2 = inlined_call_operand.hbm [shape: f32[104,128], index: 2, kind: input, shape index: {}]
  %s3 = inlined_call_operand.vmem [shape: f32[1,128], index: 3, kind: input, shape index: {}]
  %s4 = inlined_call_operand.vmem [shape: f32[1,128], index: 4, kind: output, shape index: {}]
  %s5 = sld [smem:[#allocation0]]
  $region34: #{encoder_forward.1} parent=0
    _
  %s7 = ssub.s32 1, %s5
  %s8 = scalar_select 0, %s7, %s5
  $region1: #{encoder_forward.1} parent=0
    #allocation2 [shape = 'u8[512]{0}', space=smem, size = 0x200, scoped, tag = 'input window, operand 0, single buffered']
    #allocation3 [shape = 's32[1]{0}', space=sflag, size = 0x4, scoped, tag = 'scoped memory for encoder_forward.1']
    #allocation4 [shape = 's32[1]{0}', space=sflag, size = 0x4, scoped, tag = 'scoped memory for encoder_forward.1']
    #allocation5 [shape = 'u8[53248]{0}', space=vmem, size = 0xd000, scoped, tag = 'input window, operand 2, single buffered']
    %9 = vsyncpa [#allocation4], 0
    %10 = vsyncpa [#allocation3], 0
    // Predicated region
    $region2: #{encoder_forward.1} parent=1 // pred_check
      _
    $region3: #{encoder_forward.1} parent=1 // pred_check_branch
      %12 = sbr.rel (0) target = $region5
    $region4: #{encoder_forward.1} parent=1 // pred_region
      %s14 = ssub.s32 16, 16
      %15 = vsyncadd [#allocation4], %s14
      %s17 = sshll.u32 %s0, 4
      %s18 = int_to_ptr.vmem [resolvable:$true] %s17
      %20 = dma.vmem_to_smem %s18, 16, [#allocation2], [#allocation4]
    $region5: #{encoder_forward.1} parent=1 // pred_fallthru
      _
    // Predicated region
    $region6: #{encoder_forward.1} parent=1 // pred_check
      _
    $region7: #{encoder_forward.1} parent=1 // pred_check_branch
      %22 = sbr.rel (0) target = $region9
    $region8: #{encoder_forward.1} parent=1 // pred_region
      _
    $region9: #{encoder_forward.1} parent=1 // pred_fallthru
      _
    // Predicated region
    $region10: #{encoder_forward.1} parent=1 // pred_check
      _
    $region11: #{encoder_forward.1} parent=1 // pred_check_branch
      %24 = sbr.rel (0) target = $region13
    $region12: #{encoder_forward.1} parent=1 // pred_region
      %s26 = ssub.s32 1664, 1664
      %27 = vsyncadd [#allocation3], %s26
      %s28 = sshll.u32 [#allocation5], 4
      %s29 = int_to_ptr.vmem [resolvable:$true] %s28
      %34 = dma.hbm_to_vmem [thread:$0]  %s2, 1664, %s29, [#allocation3], 128, 128, 8
    $region13: #{encoder_forward.1} parent=1 // pred_fallthru
      _
    // Predicated region
    $region14: #{encoder_forward.1} parent=1 // pred_check
      _
    $region15: #{encoder_forward.1} parent=1 // pred_check_branch
      %36 = sbr.rel (0) target = $region17
    $region16: #{encoder_forward.1} parent=1 // pred_region
      _
    $region17: #{encoder_forward.1} parent=1 // pred_fallthru
      _
    // Predicated region
    $region18: #{encoder_forward.1} parent=1 // pred_check
      _
    $region19: #{encoder_forward.1} parent=1 // pred_check_branch
      %38 = sbr.rel (0) target = $region21
    $region20: #{encoder_forward.1} parent=1 // pred_region
      %39 = dma.done [#allocation4], 16
    $region21: #{encoder_forward.1} parent=1 // pred_fallthru
      _
    // Predicated region
    $region22: #{encoder_forward.1} parent=1 // pred_check
      _
    $region23: #{encoder_forward.1} parent=1 // pred_check_branch
      %41 = sbr.rel (0) target = $region25
    $region24: #{encoder_forward.1} parent=1 // pred_region
      %42 = dma.done [#allocation3], 1664
    $region25: #{encoder_forward.1} parent=1 // pred_fallthru
      _
    %43 = sfence
    %v44 = vld [vmem:[#allocation5] sm:$0xff]
    %v45 = vld [vmem:[#allocation5 + $0x8] sm:$0xff]
    %v46 = vld [vmem:[#allocation5 + $0x10] sm:$0xff]
    %v47 = vld [vmem:[#allocation5 + $0x18] sm:$0xff]
    %v48 = vld [vmem:[%s3] sm:$0x1]
    %s49 = sld [smem:[#allocation2]]
    %s50 = scalar_lea.vmem %s1, %s49
    %v51 = vld [vmem:[%s50] sm:$0x1]
    %vm52 = vcmask 261120
    %v54 = vsel %vm52, %v48, 0
    %56 = vmatprep.subr.mxu0 0.0
    %57 = vmatpush1.msra.mxu0 %v44
    %58 = vmatprep.subr.mxu0 0.0
    %59 = vmatpush1.msra.mxu0 %v45
    %60 = vmatprep.subr.mxu0 0.0
    %61 = vmatpush1.msra.mxu0 %v46
    %62 = vmatprep.subr.mxu0 0.0
    %63 = vmatpush1.msra.mxu0 %v47
    %64 = vmatprep.subr.mxu0 0.0
    %65 = vmatpush1.msra.mxu0 0.0
    %66 = vmatprep.subr.mxu0 0.0
    %67 = vmatpush1.msra.mxu0 0.0
    %68 = vmatprep.subr.mxu0 0.0
    %69 = vmatpush1.msra.mxu0 0.0
    %70 = vmatprep.subr.mxu0 0.0
    %71 = vmatpush1.msra.mxu0 0.0
    %72 = vmatprep.subr.mxu0 0.0
    %73 = vmatpush1.msra.mxu0 0.0
    %74 = vmatprep.subr.mxu0 0.0
    %75 = vmatpush1.msra.mxu0 0.0
    %76 = vmatprep.subr.mxu0 0.0
    %77 = vmatpush1.msra.mxu0 0.0
    %78 = vmatprep.subr.mxu0 0.0
    %79 = vmatpush1.msra.mxu0 0.0
    %80 = vmatprep.subr.mxu0 0.0
    %81 = vmatpush1.msra.mxu0 0.0
    %82 = vmatprep.subr.mxu0 0.0
    %83 = vmatpush1.msra.mxu0 0.0
    %84 = vmatprep.subr.mxu0 0.0
    %85 = vmatpush1.msra.mxu0 0.0
    %86 = vmatprep.subr.mxu0 0.0
    %87 = vmatpush1.msra.mxu0 0.0
    %88 = vmatprep.subr.mxu0 0.0
    %89 = vmatpush1.msra.mxu0 0.0
    %90 = vmatprep.subr.mxu0 0.0
    %91 = vmatpush1.msra.mxu0 0.0
    %92 = vmatprep.subr.mxu0 0.0
    %93 = vmatpush1.msra.mxu0 0.0
    %94 = vmatprep.subr.mxu0 0.0
    %95 = vmatpush1.msra.mxu0 0.0
    %96 = vmatprep.subr.mxu0 0.0
    %97 = vmatpush1.msra.mxu0 0.0
    %98 = vmatprep.subr.mxu0 0.0
    %99 = vmatpush1.msra.mxu0 0.0
    %100 = vmatprep.subr.mxu0 0.0
    %101 = vmatpush1.msra.mxu0 0.0
    %102 = vmatprep.subr.mxu0 0.0
    %103 = vmatpush1.msra.mxu0 0.0
    %104 = vmatprep.subr.mxu0 0.0
    %105 = vmatpush1.msra.mxu0 0.0
    %106 = vmatprep.subr.mxu0 0.0
    %107 = vmatpush1.msra.mxu0 0.0
    %108 = vmatprep.subr.mxu0 0.0
    %109 = vmatpush1.msra.mxu0 0.0
    %110 = vmatprep.subr.mxu0 0.0
    %111 = vmatpush1.msra.mxu0 0.0
    %112 = vmatprep.subr.mxu0 0.0
    %113 = vmatpush1.msra.mxu0 0.0
    %114 = vmatprep.subr.mxu0 0.0
    %115 = vmatpush1.msra.mxu0 0.0
    %116 = vmatprep.subr.mxu0 0.0
    %117 = vmatpush1.msra.mxu0 0.0
    %118 = vmatprep.subr.mxu0 0.0
    %119 = vmatpush1.msra.mxu0 0.0
    %120 = vmatprep.mubr.f32.mxu0 0.0
    %121 = vmatmul.mubr.f32.gmra.mrb[0].mxu0 %v54
    %v122 = vpop.f32.mrb[0].mxu0
    %v123 = vadd.f32 0.0, %v122
    %v124 = vpop.f32.mrb[0].mxu0
    %125 = vdwg.mxu0
    %v126 = vadd.f32 %v51, %v123
    %v127 = vxor.u32 %v126, 2147483648
    %v128 = vmul.f32 %v127, 1.442695
    %v129 = vpow.pop %v128
    %v130 = vadd.f32 %v129, 1.0
    %v131 = vrcp.pop %v130
    %v132 = vmul.f32 1.0, %v131
    %v133 = vmul.f32 %v132, 2.0
    %v134 = vsub.f32 %v133, 1.0
    %135 = vrot.lane.b32.xlu0 %v48, 32
    %v136 = vpop.permute.xlu0 %135
    %v138 = vmul.f32 %v132, %v136
    %140 = vrot.lane.b32.xlu0 %v134, 64
    %v141 = vpop.permute.xlu0 %140
    %v143 = vmul.f32 %v132, %v141
    %145 = vrot.lane.b32.xlu0 %v143, 32
    %v146 = vpop.permute.xlu0 %145
    %v148 = vadd.f32 %v138, %v146
    %v149 = vtanh.pop %v148
    %151 = vrot.lane.b32.xlu0 %v149, 64
    %v152 = vpop.permute.xlu0 %151
    %v154 = vmul.f32 %v132, %v152
    %s155 = sld [smem:[#allocation2 + $0x1]]
    %s156 = scalar_lea.vmem %s1, %s155
    %v157 = vld [vmem:[%s156] sm:$0x1]
    %v159 = vlaneseq
    %v160 = vshrl.u32 %v159, 7
    %v161 = vsub.s32 0, %v160
    %v162 = vrot.slane %v154, %v161
    %163 = vrot.lane.b32.xlu0 %v162, 32
    %v164 = vpop.permute.xlu0 %163
    %v165 = vsel %vm52, %v164, 0
    %167 = vmatprep.subr.mxu0 0.0
    %168 = vmatpush1.msra.mxu0 %v44
    %169 = vmatprep.subr.mxu0 0.0
    %170 = vmatpush1.msra.mxu0 %v45
    %171 = vmatprep.subr.mxu0 0.0
    %172 = vmatpush1.msra.mxu0 %v46
    %173 = vmatprep.subr.mxu0 0.0
    %174 = vmatpush1.msra.mxu0 %v47
    %175 = vmatprep.subr.mxu0 0.0
    %176 = vmatpush1.msra.mxu0 0.0
    %177 = vmatprep.subr.mxu0 0.0
    %178 = vmatpush1.msra.mxu0 0.0
    %179 = vmatprep.subr.mxu0 0.0
    %180 = vmatpush1.msra.mxu0 0.0
    %181 = vmatprep.subr.mxu0 0.0
    %182 = vmatpush1.msra.mxu0 0.0
    %183 = vmatprep.subr.mxu0 0.0
    %184 = vmatpush1.msra.mxu0 0.0
    %185 = vmatprep.subr.mxu0 0.0
    %186 = vmatpush1.msra.mxu0 0.0
    %187 = vmatprep.subr.mxu0 0.0
    %188 = vmatpush1.msra.mxu0 0.0
    %189 = vmatprep.subr.mxu0 0.0
    %190 = vmatpush1.msra.mxu0 0.0
    %191 = vmatprep.subr.mxu0 0.0
    %192 = vmatpush1.msra.mxu0 0.0
    %193 = vmatprep.subr.mxu0 0.0
    %194 = vmatpush1.msra.mxu0 0.0
    %195 = vmatprep.subr.mxu0 0.0
    %196 = vmatpush1.msra.mxu0 0.0
    %197 = vmatprep.subr.mxu0 0.0
    %198 = vmatpush1.msra.mxu0 0.0
    %199 = vmatprep.subr.mxu0 0.0
    %200 = vmatpush1.msra.mxu0 0.0
    %201 = vmatprep.subr.mxu0 0.0
    %202 = vmatpush1.msra.mxu0 0.0
    %203 = vmatprep.subr.mxu0 0.0
    %204 = vmatpush1.msra.mxu0 0.0
    %205 = vmatprep.subr.mxu0 0.0
    %206 = vmatpush1.msra.mxu0 0.0
    %207 = vmatprep.subr.mxu0 0.0
    %208 = vmatpush1.msra.mxu0 0.0
    %209 = vmatprep.subr.mxu0 0.0
    %210 = vmatpush1.msra.mxu0 0.0
    %211 = vmatprep.subr.mxu0 0.0
    %212 = vmatpush1.msra.mxu0 0.0
    %213 = vmatprep.subr.mxu0 0.0
    %214 = vmatpush1.msra.mxu0 0.0
    %215 = vmatprep.subr.mxu0 0.0
    %216 = vmatpush1.msra.mxu0 0.0
    %217 = vmatprep.subr.mxu0 0.0
    %218 = vmatpush1.msra.mxu0 0.0
    %219 = vmatprep.subr.mxu0 0.0
    %220 = vmatpush1.msra.mxu0 0.0
    %221 = vmatprep.subr.mxu0 0.0
    %222 = vmatpush1.msra.mxu0 0.0
    %223 = vmatprep.subr.mxu0 0.0
    %224 = vmatpush1.msra.mxu0 0.0
    %225 = vmatprep.subr.mxu0 0.0
    %226 = vmatpush1.msra.mxu0 0.0
    %227 = vmatprep.subr.mxu0 0.0
    %228 = vmatpush1.msra.mxu0 0.0
    %229 = vmatprep.subr.mxu0 0.0
    %230 = vmatpush1.msra.mxu0 0.0
    %231 = vmatprep.mubr.f32.mxu0 0.0
    %232 = vmatmul.mubr.f32.gmra.mrb[0].mxu0 %v165
    %v233 = vpop.f32.mrb[0].mxu0
    %v234 = vadd.f32 0.0, %v233
    %v235 = vpop.f32.mrb[0].mxu0
    %236 = vdwg.mxu0
    %v237 = vadd.f32 %v157, %v234
    %v238 = vxor.u32 %v237, 2147483648
    %v239 = vmul.f32 %v238, 1.442695
    %v240 = vpow.pop %v239
    %v241 = vadd.f32 %v240, 1.0
    %v242 = vrcp.pop %v241
    %v243 = vmul.f32 1.0, %v242
    %v244 = vmul.f32 %v243, 2.0
    %v245 = vsub.f32 %v244, 1.0
    %v246 = vmul.f32 %v243, %v148
    %248 = vrot.lane.b32.xlu0 %v245, 64
    %v249 = vpop.permute.xlu0 %248
    %v251 = vmul.f32 %v243, %v249
    %253 = vrot.lane.b32.xlu0 %v251, 32
    %v254 = vpop.permute.xlu0 %253
    %v256 = vadd.f32 %v246, %v254
    %v257 = vtanh.pop %v256
    %259 = vrot.lane.b32.xlu0 %v257, 64
    %v260 = vpop.permute.xlu0 %259
    %v262 = vmul.f32 %v243, %v260
    %s263 = sld [smem:[#allocation2 + $0x2]]
    %s264 = scalar_lea.vmem %s1, %s263
    %v265 = vld [vmem:[%s264] sm:$0x1]
    %v267 = vlaneseq
    %v268 = vshrl.u32 %v267, 7
    %v269 = vsub.s32 0, %v268
    %v270 = vrot.slane %v262, %v269
    %271 = vrot.lane.b32.xlu0 %v270, 32
    %v272 = vpop.permute.xlu0 %271
    %v273 = vsel %vm52, %v272, 0
    %275 = vmatprep.subr.mxu0 0.0
    %276 = vmatpush1.msra.mxu0 %v44
    %277 = vmatprep.subr.mxu0 0.0
    %278 = vmatpush1.msra.mxu0 %v45
    %279 = vmatprep.subr.mxu0 0.0
    %280 = vmatpush1.msra.mxu0 %v46
    %281 = vmatprep.subr.mxu0 0.0
    %282 = vmatpush1.msra.mxu0 %v47
    %283 = vmatprep.subr.mxu0 0.0
    %284 = vmatpush1.msra.mxu0 0.0
    %285 = vmatprep.subr.mxu0 0.0
    %286 = vmatpush1.msra.mxu0 0.0
    %287 = vmatprep.subr.mxu0 0.0
    %288 = vmatpush1.msra.mxu0 0.0
    %289 = vmatprep.subr.mxu0 0.0
    %290 = vmatpush1.msra.mxu0 0.0
    %291 = vmatprep.subr.mxu0 0.0
    %292 = vmatpush1.msra.mxu0 0.0
    %293 = vmatprep.subr.mxu0 0.0
    %294 = vmatpush1.msra.mxu0 0.0
    %295 = vmatprep.subr.mxu0 0.0
    %296 = vmatpush1.msra.mxu0 0.0
    %297 = vmatprep.subr.mxu0 0.0
    %298 = vmatpush1.msra.mxu0 0.0
    %299 = vmatprep.subr.mxu0 0.0
    %300 = vmatpush1.msra.mxu0 0.0
    %301 = vmatprep.subr.mxu0 0.0
    %302 = vmatpush1.msra.mxu0 0.0
    %303 = vmatprep.subr.mxu0 0.0
    %304 = vmatpush1.msra.mxu0 0.0
    %305 = vmatprep.subr.mxu0 0.0
    %306 = vmatpush1.msra.mxu0 0.0
    %307 = vmatprep.subr.mxu0 0.0
    %308 = vmatpush1.msra.mxu0 0.0
    %309 = vmatprep.subr.mxu0 0.0
    %310 = vmatpush1.msra.mxu0 0.0
    %311 = vmatprep.subr.mxu0 0.0
    %312 = vmatpush1.msra.mxu0 0.0
    %313 = vmatprep.subr.mxu0 0.0
    %314 = vmatpush1.msra.mxu0 0.0
    %315 = vmatprep.subr.mxu0 0.0
    %316 = vmatpush1.msra.mxu0 0.0
    %317 = vmatprep.subr.mxu0 0.0
    %318 = vmatpush1.msra.mxu0 0.0
    %319 = vmatprep.subr.mxu0 0.0
    %320 = vmatpush1.msra.mxu0 0.0
    %321 = vmatprep.subr.mxu0 0.0
    %322 = vmatpush1.msra.mxu0 0.0
    %323 = vmatprep.subr.mxu0 0.0
    %324 = vmatpush1.msra.mxu0 0.0
    %325 = vmatprep.subr.mxu0 0.0
    %326 = vmatpush1.msra.mxu0 0.0
    %327 = vmatprep.subr.mxu0 0.0
    %328 = vmatpush1.msra.mxu0 0.0
    %329 = vmatprep.subr.mxu0 0.0
    %330 = vmatpush1.msra.mxu0 0.0
    %331 = vmatprep.subr.mxu0 0.0
    %332 = vmatpush1.msra.mxu0 0.0
    %333 = vmatprep.subr.mxu0 0.0
    %334 = vmatpush1.msra.mxu0 0.0
    %335 = vmatprep.subr.mxu0 0.0
    %336 = vmatpush1.msra.mxu0 0.0
    %337 = vmatprep.subr.mxu0 0.0
    %338 = vmatpush1.msra.mxu0 0.0
    %339 = vmatprep.mubr.f32.mxu0 0.0
    %340 = vmatmul.mubr.f32.gmra.mrb[0].mxu0 %v273
    %v341 = vpop.f32.mrb[0].mxu0
    %v342 = vadd.f32 0.0, %v341
    %v343 = vpop.f32.mrb[0].mxu0
    %344 = vdwg.mxu0
    %v345 = vadd.f32 %v265, %v342
    %v346 = vxor.u32 %v345, 2147483648
    %v347 = vmul.f32 %v346, 1.442695
    %v348 = vpow.pop %v347
    %v349 = vadd.f32 %v348, 1.0
    %v350 = vrcp.pop %v349
    %v351 = vmul.f32 1.0, %v350
    %v352 = vmul.f32 %v351, 2.0
    %v353 = vsub.f32 %v352, 1.0
    %v354 = vmul.f32 %v351, %v256
    %356 = vrot.lane.b32.xlu0 %v353, 64
    %v357 = vpop.permute.xlu0 %356
    %v359 = vmul.f32 %v351, %v357
    %361 = vrot.lane.b32.xlu0 %v359, 32
    %v362 = vpop.permute.xlu0 %361
    %v364 = vadd.f32 %v354, %v362
    %v365 = vtanh.pop %v364
    %367 = vrot.lane.b32.xlu0 %v365, 64
    %v368 = vpop.permute.xlu0 %367
    %v370 = vmul.f32 %v351, %v368
    %s371 = sld [smem:[#allocation2 + $0x3]]
    %s372 = scalar_lea.vmem %s1, %s371
    %v373 = vld [vmem:[%s372] sm:$0x1]
    %v375 = vlaneseq
    %v376 = vshrl.u32 %v375, 7
    %v377 = vsub.s32 0, %v376
    %v378 = vrot.slane %v370, %v377
    %379 = vrot.lane.b32.xlu0 %v378, 32
    %v380 = vpop.permute.xlu0 %379
    %v381 = vsel %vm52, %v380, 0
    %383 = vmatprep.subr.mxu0 0.0
    %384 = vmatpush1.msra.mxu0 %v44
    %385 = vmatprep.subr.mxu0 0.0
    %386 = vmatpush1.msra.mxu0 %v45
    %387 = vmatprep.subr.mxu0 0.0
    %388 = vmatpush1.msra.mxu0 %v46
    %389 = vmatprep.subr.mxu0 0.0
    %390 = vmatpush1.msra.mxu0 %v47
    %391 = vmatprep.subr.mxu0 0.0
    %392 = vmatpush1.msra.mxu0 0.0
    %393 = vmatprep.subr.mxu0 0.0
    %394 = vmatpush1.msra.mxu0 0.0
    %395 = vmatprep.subr.mxu0 0.0
    %396 = vmatpush1.msra.mxu0 0.0
    %397 = vmatprep.subr.mxu0 0.0
    %398 = vmatpush1.msra.mxu0 0.0
    %399 = vmatprep.subr.mxu0 0.0
    %400 = vmatpush1.msra.mxu0 0.0
    %401 = vmatprep.subr.mxu0 0.0
    %402 = vmatpush1.msra.mxu0 0.0
    %403 = vmatprep.subr.mxu0 0.0
    %404 = vmatpush1.msra.mxu0 0.0
    %405 = vmatprep.subr.mxu0 0.0
    %406 = vmatpush1.msra.mxu0 0.0
    %407 = vmatprep.subr.mxu0 0.0
    %408 = vmatpush1.msra.mxu0 0.0
    %409 = vmatprep.subr.mxu0 0.0
    %410 = vmatpush1.msra.mxu0 0.0
    %411 = vmatprep.subr.mxu0 0.0
    %412 = vmatpush1.msra.mxu0 0.0
    %413 = vmatprep.subr.mxu0 0.0
    %414 = vmatpush1.msra.mxu0 0.0
    %415 = vmatprep.subr.mxu0 0.0
    %416 = vmatpush1.msra.mxu0 0.0
    %417 = vmatprep.subr.mxu0 0.0
    %418 = vmatpush1.msra.mxu0 0.0
    %419 = vmatprep.subr.mxu0 0.0
    %420 = vmatpush1.msra.mxu0 0.0
    %421 = vmatprep.subr.mxu0 0.0
    %422 = vmatpush1.msra.mxu0 0.0
    %423 = vmatprep.subr.mxu0 0.0
    %424 = vmatpush1.msra.mxu0 0.0
    %425 = vmatprep.subr.mxu0 0.0
    %426 = vmatpush1.msra.mxu0 0.0
    %427 = vmatprep.subr.mxu0 0.0
    %428 = vmatpush1.msra.mxu0 0.0
    %429 = vmatprep.subr.mxu0 0.0
    %430 = vmatpush1.msra.mxu0 0.0
    %431 = vmatprep.subr.mxu0 0.0
    %432 = vmatpush1.msra.mxu0 0.0
    %433 = vmatprep.subr.mxu0 0.0
    %434 = vmatpush1.msra.mxu0 0.0
    %435 = vmatprep.subr.mxu0 0.0
    %436 = vmatpush1.msra.mxu0 0.0
    %437 = vmatprep.subr.mxu0 0.0
    %438 = vmatpush1.msra.mxu0 0.0
    %439 = vmatprep.subr.mxu0 0.0
    %440 = vmatpush1.msra.mxu0 0.0
    %441 = vmatprep.subr.mxu0 0.0
    %442 = vmatpush1.msra.mxu0 0.0
    %443 = vmatprep.subr.mxu0 0.0
    %444 = vmatpush1.msra.mxu0 0.0
    %445 = vmatprep.subr.mxu0 0.0
    %446 = vmatpush1.msra.mxu0 0.0
    %447 = vmatprep.mubr.f32.mxu0 0.0
    %448 = vmatmul.mubr.f32.gmra.mrb[0].mxu0 %v381
    %v449 = vpop.f32.mrb[0].mxu0
    %v450 = vadd.f32 0.0, %v449
    %v451 = vpop.f32.mrb[0].mxu0
    %452 = vdwg.mxu0
    %v453 = vadd.f32 %v373, %v450
    %v454 = vxor.u32 %v453, 2147483648
    %v455 = vmul.f32 %v454, 1.442695
    %v456 = vpow.pop %v455
    %v457 = vadd.f32 %v456, 1.0
    %v458 = vrcp.pop %v457
    %v459 = vmul.f32 1.0, %v458
    %v460 = vmul.f32 %v459, 2.0
    %v461 = vsub.f32 %v460, 1.0
    %v462 = vmul.f32 %v459, %v364
    %464 = vrot.lane.b32.xlu0 %v461, 64
    %v465 = vpop.permute.xlu0 %464
    %v467 = vmul.f32 %v459, %v465
    %469 = vrot.lane.b32.xlu0 %v467, 32
    %v470 = vpop.permute.xlu0 %469
    %v472 = vadd.f32 %v462, %v470
    %v473 = vtanh.pop %v472
    %475 = vrot.lane.b32.xlu0 %v473, 64
    %v476 = vpop.permute.xlu0 %475
    %v478 = vmul.f32 %v459, %v476
    %s479 = sld [smem:[#allocation2 + $0x4]]
    %s480 = scalar_lea.vmem %s1, %s479
    %v481 = vld [vmem:[%s480] sm:$0x1]
    %v483 = vlaneseq
    %v484 = vshrl.u32 %v483, 7
    %v485 = vsub.s32 0, %v484
    %v486 = vrot.slane %v478, %v485
    %487 = vrot.lane.b32.xlu0 %v486, 32
    %v488 = vpop.permute.xlu0 %487
    %v489 = vsel %vm52, %v488, 0
    %491 = vmatprep.subr.mxu0 0.0
    %492 = vmatpush1.msra.mxu0 %v44
    %493 = vmatprep.subr.mxu0 0.0
    %494 = vmatpush1.msra.mxu0 %v45
    %495 = vmatprep.subr.mxu0 0.0
    %496 = vmatpush1.msra.mxu0 %v46
    %497 = vmatprep.subr.mxu0 0.0
    %498 = vmatpush1.msra.mxu0 %v47
    %499 = vmatprep.subr.mxu0 0.0
    %500 = vmatpush1.msra.mxu0 0.0
    %501 = vmatprep.subr.mxu0 0.0
    %502 = vmatpush1.msra.mxu0 0.0
    %503 = vmatprep.subr.mxu0 0.0
    %504 = vmatpush1.msra.mxu0 0.0
    %505 = vmatprep.subr.mxu0 0.0
    %506 = vmatpush1.msra.mxu0 0.0
    %507 = vmatprep.subr.mxu0 0.0
    %508 = vmatpush1.msra.mxu0 0.0
    %509 = vmatprep.subr.mxu0 0.0
    %510 = vmatpush1.msra.mxu0 0.0
    %511 = vmatprep.subr.mxu0 0.0
    %512 = vmatpush1.msra.mxu0 0.0
    %513 = vmatprep.subr.mxu0 0.0
    %514 = vmatpush1.msra.mxu0 0.0
    %515 = vmatprep.subr.mxu0 0.0
    %516 = vmatpush1.msra.mxu0 0.0
    %517 = vmatprep.subr.mxu0 0.0
    %518 = vmatpush1.msra.mxu0 0.0
    %519 = vmatprep.subr.mxu0 0.0
    %520 = vmatpush1.msra.mxu0 0.0
    %521 = vmatprep.subr.mxu0 0.0
    %522 = vmatpush1.msra.mxu0 0.0
    %523 = vmatprep.subr.mxu0 0.0
    %524 = vmatpush1.msra.mxu0 0.0
    %525 = vmatprep.subr.mxu0 0.0
    %526 = vmatpush1.msra.mxu0 0.0
    %527 = vmatprep.subr.mxu0 0.0
    %528 = vmatpush1.msra.mxu0 0.0
    %529 = vmatprep.subr.mxu0 0.0
    %530 = vmatpush1.msra.mxu0 0.0
    %531 = vmatprep.subr.mxu0 0.0
    %532 = vmatpush1.msra.mxu0 0.0
    %533 = vmatprep.subr.mxu0 0.0
    %534 = vmatpush1.msra.mxu0 0.0
    %535 = vmatprep.subr.mxu0 0.0
    %536 = vmatpush1.msra.mxu0 0.0
    %537 = vmatprep.subr.mxu0 0.0
    %538 = vmatpush1.msra.mxu0 0.0
    %539 = vmatprep.subr.mxu0 0.0
    %540 = vmatpush1.msra.mxu0 0.0
    %541 = vmatprep.subr.mxu0 0.0
    %542 = vmatpush1.msra.mxu0 0.0
    %543 = vmatprep.subr.mxu0 0.0
    %544 = vmatpush1.msra.mxu0 0.0
    %545 = vmatprep.subr.mxu0 0.0
    %546 = vmatpush1.msra.mxu0 0.0
    %547 = vmatprep.subr.mxu0 0.0
    %548 = vmatpush1.msra.mxu0 0.0
    %549 = vmatprep.subr.mxu0 0.0
    %550 = vmatpush1.msra.mxu0 0.0
    %551 = vmatprep.subr.mxu0 0.0
    %552 = vmatpush1.msra.mxu0 0.0
    %553 = vmatprep.subr.mxu0 0.0
    %554 = vmatpush1.msra.mxu0 0.0
    %555 = vmatprep.mubr.f32.mxu0 0.0
    %556 = vmatmul.mubr.f32.gmra.mrb[0].mxu0 %v489
    %v557 = vpop.f32.mrb[0].mxu0
    %v558 = vadd.f32 0.0, %v557
    %v559 = vpop.f32.mrb[0].mxu0
    %560 = vdwg.mxu0
    %v561 = vadd.f32 %v481, %v558
    %v562 = vxor.u32 %v561, 2147483648
    %v563 = vmul.f32 %v562, 1.442695
    %v564 = vpow.pop %v563
    %v565 = vadd.f32 %v564, 1.0
    %v566 = vrcp.pop %v565
    %v567 = vmul.f32 1.0, %v566
    %v568 = vmul.f32 %v567, 2.0
    %v569 = vsub.f32 %v568, 1.0
    %v570 = vmul.f32 %v567, %v472
    %572 = vrot.lane.b32.xlu0 %v569, 64
    %v573 = vpop.permute.xlu0 %572
    %v575 = vmul.f32 %v567, %v573
    %577 = vrot.lane.b32.xlu0 %v575, 32
    %v578 = vpop.permute.xlu0 %577
    %v580 = vadd.f32 %v570, %v578
    %v581 = vtanh.pop %v580
    %583 = vrot.lane.b32.xlu0 %v581, 64
    %v584 = vpop.permute.xlu0 %583
    %v586 = vmul.f32 %v567, %v584
    %s587 = sld [smem:[#allocation2 + $0x5]]
    %s588 = scalar_lea.vmem %s1, %s587
    %v589 = vld [vmem:[%s588] sm:$0x1]
    %v591 = vlaneseq
    %v592 = vshrl.u32 %v591, 7
    %v593 = vsub.s32 0, %v592
    %v594 = vrot.slane %v586, %v593
    %595 = vrot.lane.b32.xlu0 %v594, 32
    %v596 = vpop.permute.xlu0 %595
    %v597 = vsel %vm52, %v596, 0
    %599 = vmatprep.subr.mxu0 0.0
    %600 = vmatpush1.msra.mxu0 %v44
    %601 = vmatprep.subr.mxu0 0.0
    %602 = vmatpush1.msra.mxu0 %v45
    %603 = vmatprep.subr.mxu0 0.0
    %604 = vmatpush1.msra.mxu0 %v46
    %605 = vmatprep.subr.mxu0 0.0
    %606 = vmatpush1.msra.mxu0 %v47
    %607 = vmatprep.subr.mxu0 0.0
    %608 = vmatpush1.msra.mxu0 0.0
    %609 = vmatprep.subr.mxu0 0.0
    %610 = vmatpush1.msra.mxu0 0.0
    %611 = vmatprep.subr.mxu0 0.0
    %612 = vmatpush1.msra.mxu0 0.0
    %613 = vmatprep.subr.mxu0 0.0
    %614 = vmatpush1.msra.mxu0 0.0
    %615 = vmatprep.subr.mxu0 0.0
    %616 = vmatpush1.msra.mxu0 0.0
    %617 = vmatprep.subr.mxu0 0.0
    %618 = vmatpush1.msra.mxu0 0.0
    %619 = vmatprep.subr.mxu0 0.0
    %620 = vmatpush1.msra.mxu0 0.0
    %621 = vmatprep.subr.mxu0 0.0
    %622 = vmatpush1.msra.mxu0 0.0
    %623 = vmatprep.subr.mxu0 0.0
    %624 = vmatpush1.msra.mxu0 0.0
    %625 = vmatprep.subr.mxu0 0.0
    %626 = vmatpush1.msra.mxu0 0.0
    %627 = vmatprep.subr.mxu0 0.0
    %628 = vmatpush1.msra.mxu0 0.0
    %629 = vmatprep.subr.mxu0 0.0
    %630 = vmatpush1.msra.mxu0 0.0
    %631 = vmatprep.subr.mxu0 0.0
    %632 = vmatpush1.msra.mxu0 0.0
    %633 = vmatprep.subr.mxu0 0.0
    %634 = vmatpush1.msra.mxu0 0.0
    %635 = vmatprep.subr.mxu0 0.0
    %636 = vmatpush1.msra.mxu0 0.0
    %637 = vmatprep.subr.mxu0 0.0
    %638 = vmatpush1.msra.mxu0 0.0
    %639 = vmatprep.subr.mxu0 0.0
    %640 = vmatpush1.msra.mxu0 0.0
    %641 = vmatprep.subr.mxu0 0.0
    %642 = vmatpush1.msra.mxu0 0.0
    %643 = vmatprep.subr.mxu0 0.0
    %644 = vmatpush1.msra.mxu0 0.0
    %645 = vmatprep.subr.mxu0 0.0
    %646 = vmatpush1.msra.mxu0 0.0
    %647 = vmatprep.subr.mxu0 0.0
    %648 = vmatpush1.msra.mxu0 0.0
    %649 = vmatprep.subr.mxu0 0.0
    %650 = vmatpush1.msra.mxu0 0.0
    %651 = vmatprep.subr.mxu0 0.0
    %652 = vmatpush1.msra.mxu0 0.0
    %653 = vmatprep.subr.mxu0 0.0
    %654 = vmatpush1.msra.mxu0 0.0
    %655 = vmatprep.subr.mxu0 0.0
    %656 = vmatpush1.msra.mxu0 0.0
    %657 = vmatprep.subr.mxu0 0.0
    %658 = vmatpush1.msra.mxu0 0.0
    %659 = vmatprep.subr.mxu0 0.0
    %660 = vmatpush1.msra.mxu0 0.0
    %661 = vmatprep.subr.mxu0 0.0
    %662 = vmatpush1.msra.mxu0 0.0
    %663 = vmatprep.mubr.f32.mxu0 0.0
    %664 = vmatmul.mubr.f32.gmra.mrb[0].mxu0 %v597
    %v665 = vpop.f32.mrb[0].mxu0
    %v666 = vadd.f32 0.0, %v665
    %v667 = vpop.f32.mrb[0].mxu0
    %668 = vdwg.mxu0
    %v669 = vadd.f32 %v589, %v666
    %v670 = vxor.u32 %v669, 2147483648
    %v671 = vmul.f32 %v670, 1.442695
    %v672 = vpow.pop %v671
    %v673 = vadd.f32 %v672, 1.0
    %v674 = vrcp.pop %v673
    %v675 = vmul.f32 1.0, %v674
    %v676 = vmul.f32 %v675, 2.0
    %v677 = vsub.f32 %v676, 1.0
    %v678 = vmul.f32 %v675, %v580
    %680 = vrot.lane.b32.xlu0 %v677, 64
    %v681 = vpop.permute.xlu0 %680
    %v683 = vmul.f32 %v675, %v681
    %685 = vrot.lane.b32.xlu0 %v683, 32
    %v686 = vpop.permute.xlu0 %685
    %v688 = vadd.f32 %v678, %v686
    %v689 = vtanh.pop %v688
    %691 = vrot.lane.b32.xlu0 %v689, 64
    %v692 = vpop.permute.xlu0 %691
    %v694 = vmul.f32 %v675, %v692
    %s695 = sld [smem:[#allocation2 + $0x6]]
    %s696 = scalar_lea.vmem %s1, %s695
    %v697 = vld [vmem:[%s696] sm:$0x1]
    %v699 = vlaneseq
    %v700 = vshrl.u32 %v699, 7
    %v701 = vsub.s32 0, %v700
    %v702 = vrot.slane %v694, %v701
    %703 = vrot.lane.b32.xlu0 %v702, 32
    %v704 = vpop.permute.xlu0 %703
    %v705 = vsel %vm52, %v704, 0
    %707 = vmatprep.subr.mxu0 0.0
    %708 = vmatpush1.msra.mxu0 %v44
    %709 = vmatprep.subr.mxu0 0.0
    %710 = vmatpush1.msra.mxu0 %v45
    %711 = vmatprep.subr.mxu0 0.0
    %712 = vmatpush1.msra.mxu0 %v46
    %713 = vmatprep.subr.mxu0 0.0
    %714 = vmatpush1.msra.mxu0 %v47
    %715 = vmatprep.subr.mxu0 0.0
    %716 = vmatpush1.msra.mxu0 0.0
    %717 = vmatprep.subr.mxu0 0.0
    %718 = vmatpush1.msra.mxu0 0.0
    %719 = vmatprep.subr.mxu0 0.0
    %720 = vmatpush1.msra.mxu0 0.0
    %721 = vmatprep.subr.mxu0 0.0
    %722 = vmatpush1.msra.mxu0 0.0
    %723 = vmatprep.subr.mxu0 0.0
    %724 = vmatpush1.msra.mxu0 0.0
    %725 = vmatprep.subr.mxu0 0.0
    %726 = vmatpush1.msra.mxu0 0.0
    %727 = vmatprep.subr.mxu0 0.0
    %728 = vmatpush1.msra.mxu0 0.0
    %729 = vmatprep.subr.mxu0 0.0
    %730 = vmatpush1.msra.mxu0 0.0
    %731 = vmatprep.subr.mxu0 0.0
    %732 = vmatpush1.msra.mxu0 0.0
    %733 = vmatprep.subr.mxu0 0.0
    %734 = vmatpush1.msra.mxu0 0.0
    %735 = vmatprep.subr.mxu0 0.0
    %736 = vmatpush1.msra.mxu0 0.0
    %737 = vmatprep.subr.mxu0 0.0
    %738 = vmatpush1.msra.mxu0 0.0
    %739 = vmatprep.subr.mxu0 0.0
    %740 = vmatpush1.msra.mxu0 0.0
    %741 = vmatprep.subr.mxu0 0.0
    %742 = vmatpush1.msra.mxu0 0.0
    %743 = vmatprep.subr.mxu0 0.0
    %744 = vmatpush1.msra.mxu0 0.0
    %745 = vmatprep.subr.mxu0 0.0
    %746 = vmatpush1.msra.mxu0 0.0
    %747 = vmatprep.subr.mxu0 0.0
    %748 = vmatpush1.msra.mxu0 0.0
    %749 = vmatprep.subr.mxu0 0.0
    %750 = vmatpush1.msra.mxu0 0.0
    %751 = vmatprep.subr.mxu0 0.0
    %752 = vmatpush1.msra.mxu0 0.0
    %753 = vmatprep.subr.mxu0 0.0
    %754 = vmatpush1.msra.mxu0 0.0
    %755 = vmatprep.subr.mxu0 0.0
    %756 = vmatpush1.msra.mxu0 0.0
    %757 = vmatprep.subr.mxu0 0.0
    %758 = vmatpush1.msra.mxu0 0.0
    %759 = vmatprep.subr.mxu0 0.0
    %760 = vmatpush1.msra.mxu0 0.0
    %761 = vmatprep.subr.mxu0 0.0
    %762 = vmatpush1.msra.mxu0 0.0
    %763 = vmatprep.subr.mxu0 0.0
    %764 = vmatpush1.msra.mxu0 0.0
    %765 = vmatprep.subr.mxu0 0.0
    %766 = vmatpush1.msra.mxu0 0.0
    %767 = vmatprep.subr.mxu0 0.0
    %768 = vmatpush1.msra.mxu0 0.0
    %769 = vmatprep.subr.mxu0 0.0
    %770 = vmatpush1.msra.mxu0 0.0
    %771 = vmatprep.mubr.f32.mxu0 0.0
    %772 = vmatmul.mubr.f32.gmra.mrb[0].mxu0 %v705
    %v773 = vpop.f32.mrb[0].mxu0
    %v774 = vadd.f32 0.0, %v773
    %v775 = vpop.f32.mrb[0].mxu0
    %776 = vdwg.mxu0
    %v777 = vadd.f32 %v697, %v774
    %v778 = vxor.u32 %v777, 2147483648
    %v779 = vmul.f32 %v778, 1.442695
    %v780 = vpow.pop %v779
    %v781 = vadd.f32 %v780, 1.0
    %v782 = vrcp.pop %v781
    %v783 = vmul.f32 1.0, %v782
    %v784 = vmul.f32 %v783, 2.0
    %v785 = vsub.f32 %v784, 1.0
    %v786 = vmul.f32 %v783, %v688
    %788 = vrot.lane.b32.xlu0 %v785, 64
    %v789 = vpop.permute.xlu0 %788
    %v791 = vmul.f32 %v783, %v789
    %793 = vrot.lane.b32.xlu0 %v791, 32
    %v794 = vpop.permute.xlu0 %793
    %v796 = vadd.f32 %v786, %v794
    %v797 = vtanh.pop %v796
    %799 = vrot.lane.b32.xlu0 %v797, 64
    %v800 = vpop.permute.xlu0 %799
    %v802 = vmul.f32 %v783, %v800
    %s803 = sld [smem:[#allocation2 + $0x7]]
    %s804 = scalar_lea.vmem %s1, %s803
    %v805 = vld [vmem:[%s804] sm:$0x1]
    %v807 = vlaneseq
    %v808 = vshrl.u32 %v807, 7
    %v809 = vsub.s32 0, %v808
    %v810 = vrot.slane %v802, %v809
    %811 = vrot.lane.b32.xlu0 %v810, 32
    %v812 = vpop.permute.xlu0 %811
    %v813 = vsel %vm52, %v812, 0
    %815 = vmatprep.subr.mxu0 0.0
    %816 = vmatpush1.msra.mxu0 %v44
    %817 = vmatprep.subr.mxu0 0.0
    %818 = vmatpush1.msra.mxu0 %v45
    %819 = vmatprep.subr.mxu0 0.0
    %820 = vmatpush1.msra.mxu0 %v46
    %821 = vmatprep.subr.mxu0 0.0
    %822 = vmatpush1.msra.mxu0 %v47
    %823 = vmatprep.subr.mxu0 0.0
    %824 = vmatpush1.msra.mxu0 0.0
    %825 = vmatprep.subr.mxu0 0.0
    %826 = vmatpush1.msra.mxu0 0.0
    %827 = vmatprep.subr.mxu0 0.0
    %828 = vmatpush1.msra.mxu0 0.0
    %829 = vmatprep.subr.mxu0 0.0
    %830 = vmatpush1.msra.mxu0 0.0
    %831 = vmatprep.subr.mxu0 0.0
    %832 = vmatpush1.msra.mxu0 0.0
    %833 = vmatprep.subr.mxu0 0.0
    %834 = vmatpush1.msra.mxu0 0.0
    %835 = vmatprep.subr.mxu0 0.0
    %836 = vmatpush1.msra.mxu0 0.0
    %837 = vmatprep.subr.mxu0 0.0
    %838 = vmatpush1.msra.mxu0 0.0
    %839 = vmatprep.subr.mxu0 0.0
    %840 = vmatpush1.msra.mxu0 0.0
    %841 = vmatprep.subr.mxu0 0.0
    %842 = vmatpush1.msra.mxu0 0.0
    %843 = vmatprep.subr.mxu0 0.0
    %844 = vmatpush1.msra.mxu0 0.0
    %845 = vmatprep.subr.mxu0 0.0
    %846 = vmatpush1.msra.mxu0 0.0
    %847 = vmatprep.subr.mxu0 0.0
    %848 = vmatpush1.msra.mxu0 0.0
    %849 = vmatprep.subr.mxu0 0.0
    %850 = vmatpush1.msra.mxu0 0.0
    %851 = vmatprep.subr.mxu0 0.0
    %852 = vmatpush1.msra.mxu0 0.0
    %853 = vmatprep.subr.mxu0 0.0
    %854 = vmatpush1.msra.mxu0 0.0
    %855 = vmatprep.subr.mxu0 0.0
    %856 = vmatpush1.msra.mxu0 0.0
    %857 = vmatprep.subr.mxu0 0.0
    %858 = vmatpush1.msra.mxu0 0.0
    %859 = vmatprep.subr.mxu0 0.0
    %860 = vmatpush1.msra.mxu0 0.0
    %861 = vmatprep.subr.mxu0 0.0
    %862 = vmatpush1.msra.mxu0 0.0
    %863 = vmatprep.subr.mxu0 0.0
    %864 = vmatpush1.msra.mxu0 0.0
    %865 = vmatprep.subr.mxu0 0.0
    %866 = vmatpush1.msra.mxu0 0.0
    %867 = vmatprep.subr.mxu0 0.0
    %868 = vmatpush1.msra.mxu0 0.0
    %869 = vmatprep.subr.mxu0 0.0
    %870 = vmatpush1.msra.mxu0 0.0
    %871 = vmatprep.subr.mxu0 0.0
    %872 = vmatpush1.msra.mxu0 0.0
    %873 = vmatprep.subr.mxu0 0.0
    %874 = vmatpush1.msra.mxu0 0.0
    %875 = vmatprep.subr.mxu0 0.0
    %876 = vmatpush1.msra.mxu0 0.0
    %877 = vmatprep.subr.mxu0 0.0
    %878 = vmatpush1.msra.mxu0 0.0
    %879 = vmatprep.mubr.f32.mxu0 0.0
    %880 = vmatmul.mubr.f32.gmra.mrb[0].mxu0 %v813
    %v881 = vpop.f32.mrb[0].mxu0
    %v882 = vadd.f32 0.0, %v881
    %v883 = vpop.f32.mrb[0].mxu0
    %884 = vdwg.mxu0
    %v885 = vadd.f32 %v805, %v882
    %v886 = vxor.u32 %v885, 2147483648
    %v887 = vmul.f32 %v886, 1.442695
    %v888 = vpow.pop %v887
    %v889 = vadd.f32 %v888, 1.0
    %v890 = vrcp.pop %v889
    %v891 = vmul.f32 1.0, %v890
    %v892 = vmul.f32 %v891, 2.0
    %v893 = vsub.f32 %v892, 1.0
    %v894 = vmul.f32 %v891, %v796
    %896 = vrot.lane.b32.xlu0 %v893, 64
    %v897 = vpop.permute.xlu0 %896
    %v899 = vmul.f32 %v891, %v897
    %901 = vrot.lane.b32.xlu0 %v899, 32
    %v902 = vpop.permute.xlu0 %901
    %v904 = vadd.f32 %v894, %v902
    %v905 = vtanh.pop %v904
    %907 = vrot.lane.b32.xlu0 %v905, 64
    %v908 = vpop.permute.xlu0 %907
    %v910 = vmul.f32 %v891, %v908
    %v911 = vld [vmem:[#allocation5 + $0x20] sm:$0xff]
    %v912 = vld [vmem:[#allocation5 + $0x28] sm:$0xff]
    %v913 = vld [vmem:[#allocation5 + $0x30] sm:$0xff]
    %v914 = vld [vmem:[#allocation5 + $0x38] sm:$0xff]
    %v915 = vld [vmem:[#allocation5 + $0x40] sm:$0xff]
    %v916 = vld [vmem:[#allocation5 + $0x48] sm:$0xff]
    %v917 = vld [vmem:[#allocation5 + $0x50] sm:$0xff]
    %v918 = vld [vmem:[#allocation5 + $0x58] sm:$0xff]
    %v919 = vld [vmem:[#allocation5 + $0x60] sm:$0x1]
    %v921 = vlaneseq
    %v922 = vshrl.u32 %v921, 7
    %v923 = vsub.s32 0, %v922
    %v924 = vrot.slane %v904, %v923
    %925 = vrot.lane.b32.xlu0 %v924, 96
    %v926 = vpop.permute.xlu0 %925
    %v927 = vsel %vm52, %v926, 0
    %929 = vmatprep.subr.mxu0 0.0
    %930 = vmatpush1.msra.mxu0 %v915
    %931 = vmatprep.subr.mxu0 0.0
    %932 = vmatpush1.msra.mxu0 %v916
    %933 = vmatprep.subr.mxu0 0.0
    %934 = vmatpush1.msra.mxu0 %v917
    %935 = vmatprep.subr.mxu0 0.0
    %936 = vmatpush1.msra.mxu0 %v918
    %937 = vmatprep.subr.mxu0 0.0
    %938 = vmatpush1.msra.mxu0 0.0
    %939 = vmatprep.subr.mxu0 0.0
    %940 = vmatpush1.msra.mxu0 0.0
    %941 = vmatprep.subr.mxu0 0.0
    %942 = vmatpush1.msra.mxu0 0.0
    %943 = vmatprep.subr.mxu0 0.0
    %944 = vmatpush1.msra.mxu0 0.0
    %945 = vmatprep.subr.mxu0 0.0
    %946 = vmatpush1.msra.mxu0 0.0
    %947 = vmatprep.subr.mxu0 0.0
    %948 = vmatpush1.msra.mxu0 0.0
    %949 = vmatprep.subr.mxu0 0.0
    %950 = vmatpush1.msra.mxu0 0.0
    %951 = vmatprep.subr.mxu0 0.0
    %952 = vmatpush1.msra.mxu0 0.0
    %953 = vmatprep.subr.mxu0 0.0
    %954 = vmatpush1.msra.mxu0 0.0
    %955 = vmatprep.subr.mxu0 0.0
    %956 = vmatpush1.msra.mxu0 0.0
    %957 = vmatprep.subr.mxu0 0.0
    %958 = vmatpush1.msra.mxu0 0.0
    %959 = vmatprep.subr.mxu0 0.0
    %960 = vmatpush1.msra.mxu0 0.0
    %961 = vmatprep.subr.mxu0 0.0
    %962 = vmatpush1.msra.mxu0 0.0
    %963 = vmatprep.subr.mxu0 0.0
    %964 = vmatpush1.msra.mxu0 0.0
    %965 = vmatprep.subr.mxu0 0.0
    %966 = vmatpush1.msra.mxu0 0.0
    %967 = vmatprep.subr.mxu0 0.0
    %968 = vmatpush1.msra.mxu0 0.0
    %969 = vmatprep.subr.mxu0 0.0
    %970 = vmatpush1.msra.mxu0 0.0
    %971 = vmatprep.subr.mxu0 0.0
    %972 = vmatpush1.msra.mxu0 0.0
    %973 = vmatprep.subr.mxu0 0.0
    %974 = vmatpush1.msra.mxu0 0.0
    %975 = vmatprep.subr.mxu0 0.0
    %976 = vmatpush1.msra.mxu0 0.0
    %977 = vmatprep.subr.mxu0 0.0
    %978 = vmatpush1.msra.mxu0 0.0
    %979 = vmatprep.subr.mxu0 0.0
    %980 = vmatpush1.msra.mxu0 0.0
    %981 = vmatprep.subr.mxu0 0.0
    %982 = vmatpush1.msra.mxu0 0.0
    %983 = vmatprep.subr.mxu0 0.0
    %984 = vmatpush1.msra.mxu0 0.0
    %985 = vmatprep.subr.mxu0 0.0
    %986 = vmatpush1.msra.mxu0 0.0
    %987 = vmatprep.subr.mxu0 0.0
    %988 = vmatpush1.msra.mxu0 0.0
    %989 = vmatprep.subr.mxu0 0.0
    %990 = vmatpush1.msra.mxu0 0.0
    %991 = vmatprep.subr.mxu0 0.0
    %992 = vmatpush1.msra.mxu0 0.0
    %993 = vmatprep.mubr.f32.mxu0 0.0
    %994 = vmatmul.mubr.f32.gmra.mrb[0].mxu0 %v927
    %v995 = vpop.f32.mrb[0].mxu0
    %v996 = vadd.f32 0.0, %v995
    %v997 = vpop.f32.mrb[0].mxu0
    %998 = vdwg.mxu0
    %v1000 = vlaneseq
    %v1001 = vshrl.u32 %v1000, 7
    %v1002 = vsub.s32 0, %v1001
    %v1003 = vrot.slane %v910, %v1002
    %1004 = vrot.lane.b32.xlu0 %v1003, 32
    %v1005 = vpop.permute.xlu0 %1004
    %v1006 = vsel %vm52, %v1005, 0
    %1008 = vmatprep.subr.mxu0 0.0
    %1009 = vmatpush1.msra.mxu0 %v911
    %1010 = vmatprep.subr.mxu0 0.0
    %1011 = vmatpush1.msra.mxu0 %v912
    %1012 = vmatprep.subr.mxu0 0.0
    %1013 = vmatpush1.msra.mxu0 %v913
    %1014 = vmatprep.subr.mxu0 0.0
    %1015 = vmatpush1.msra.mxu0 %v914
    %1016 = vmatprep.subr.mxu0 0.0
    %1017 = vmatpush1.msra.mxu0 0.0
    %1018 = vmatprep.subr.mxu0 0.0
    %1019 = vmatpush1.msra.mxu0 0.0
    %1020 = vmatprep.subr.mxu0 0.0
    %1021 = vmatpush1.msra.mxu0 0.0
    %1022 = vmatprep.subr.mxu0 0.0
    %1023 = vmatpush1.msra.mxu0 0.0
    %1024 = vmatprep.subr.mxu0 0.0
    %1025 = vmatpush1.msra.mxu0 0.0
    %1026 = vmatprep.subr.mxu0 0.0
    %1027 = vmatpush1.msra.mxu0 0.0
    %1028 = vmatprep.subr.mxu0 0.0
    %1029 = vmatpush1.msra.mxu0 0.0
    %1030 = vmatprep.subr.mxu0 0.0
    %1031 = vmatpush1.msra.mxu0 0.0
    %1032 = vmatprep.subr.mxu0 0.0
    %1033 = vmatpush1.msra.mxu0 0.0
    %1034 = vmatprep.subr.mxu0 0.0
    %1035 = vmatpush1.msra.mxu0 0.0
    %1036 = vmatprep.subr.mxu0 0.0
    %1037 = vmatpush1.msra.mxu0 0.0
    %1038 = vmatprep.subr.mxu0 0.0
    %1039 = vmatpush1.msra.mxu0 0.0
    %1040 = vmatprep.subr.mxu0 0.0
    %1041 = vmatpush1.msra.mxu0 0.0
    %1042 = vmatprep.subr.mxu0 0.0
    %1043 = vmatpush1.msra.mxu0 0.0
    %1044 = vmatprep.subr.mxu0 0.0
    %1045 = vmatpush1.msra.mxu0 0.0
    %1046 = vmatprep.subr.mxu0 0.0
    %1047 = vmatpush1.msra.mxu0 0.0
    %1048 = vmatprep.subr.mxu0 0.0
    %1049 = vmatpush1.msra.mxu0 0.0
    %1050 = vmatprep.subr.mxu0 0.0
    %1051 = vmatpush1.msra.mxu0 0.0
    %1052 = vmatprep.subr.mxu0 0.0
    %1053 = vmatpush1.msra.mxu0 0.0
    %1054 = vmatprep.subr.mxu0 0.0
    %1055 = vmatpush1.msra.mxu0 0.0
    %1056 = vmatprep.subr.mxu0 0.0
    %1057 = vmatpush1.msra.mxu0 0.0
    %1058 = vmatprep.subr.mxu0 0.0
    %1059 = vmatpush1.msra.mxu0 0.0
    %1060 = vmatprep.subr.mxu0 0.0
    %1061 = vmatpush1.msra.mxu0 0.0
    %1062 = vmatprep.subr.mxu0 0.0
    %1063 = vmatpush1.msra.mxu0 0.0
    %1064 = vmatprep.subr.mxu0 0.0
    %1065 = vmatpush1.msra.mxu0 0.0
    %1066 = vmatprep.subr.mxu0 0.0
    %1067 = vmatpush1.msra.mxu0 0.0
    %1068 = vmatprep.subr.mxu0 0.0
    %1069 = vmatpush1.msra.mxu0 0.0
    %1070 = vmatprep.subr.mxu0 0.0
    %1071 = vmatpush1.msra.mxu0 0.0
    %1072 = vmatprep.mubr.f32.mxu0 0.0
    %1073 = vmatmul.mubr.f32.gmra.mrb[0].mxu0 %v1006
    %v1074 = vpop.f32.mrb[0].mxu0
    %v1075 = vadd.f32 %v996, %v1074
    %v1076 = vpop.f32.mrb[0].mxu0
    %1077 = vdwg.mxu0
    %v1078 = vadd.f32 %v1075, %v919
    %v1079 = vmul.f32 %v1078, 0.5
    %v1080 = vmul.f32 %v1079, 1.442695
    %v1081 = vpow.pop %v1080
    %v1082 = vmul.f32 %v48, %v1081
    %v1085 = vunpack.c.l.s4 1966171168
    %v1086 = vunpack.c.0.s8 %v1085
    %v1087 = vlaneseq
    %v1088 = vshrl.u32 %v1087, 7
    %v1089 = vsub.s32 %v1086, %v1088
    %v1090 = vrot.slane %v1078, %v1089
    %v1092 = vunpack.c.l.s4 1966171168
    %v1093 = vunpack.c.0.s8 %v1092
    %v1094 = vlaneseq
    %v1095 = vshrl.u32 %v1094, 7
    %v1096 = vsub.s32 %v1093, %v1095
    %v1097 = vrot.slane %v1090, %v1096
    %1098 = vrot.lane.b32.xlu0 %v1097, 32
    %v1099 = vpop.permute.xlu0 %1098
    %v1101 = vadd.f32 %v1082, %v1099
    %v1103 = vlaneseq
    %v1104 = vshrl.u32 %v1103, 7
    %v1105 = vsub.s32 0, %v1104
    %v1106 = vrot.slane %v1101, %v1105
    %1107 = vrot.lane.b32.xlu0 %v1106, 96
    %v1108 = vpop.permute.xlu0 %1107
    %vm1110 = vcmask 253952
    %1111 = vst.msk [vmem:[%s4] sm:$0x1] %vm1110, %v1108
    %1112 = vrot.lane.b32.xlu0 %v1078, 32
    %v1113 = vpop.permute.xlu0 %1112
    %vm1115 = vcmask 778496
    %1116 = vst.msk [vmem:[%s4] sm:$0x1] %vm1115, %v1113
    // Predicated region
    $region26: #{encoder_forward.1} parent=1 // pred_check
      _
    $region27: #{encoder_forward.1} parent=1 // pred_check_branch
      %1118 = sbr.rel (0) target = $region29
    $region28: #{encoder_forward.1} parent=1 // pred_region
      _
    $region29: #{encoder_forward.1} parent=1 // pred_fallthru
      _
    // Predicated region
    $region30: #{encoder_forward.1} parent=1 // pred_check
      _
    $region31: #{encoder_forward.1} parent=1 // pred_check_branch
      %1120 = sbr.rel (0) target = $region33
    $region32: #{encoder_forward.1} parent=1 // pred_region
      _
    $region33: #{encoder_forward.1} parent=1 // pred_fallthru
      _
    %1121 = vsyncpa [#allocation3], 1
    %1122 = vsyncpa [#allocation4], 1

</llo_original>
